<compile_context>
chip_gen: v6e
topology: v6e:2x2x1
jax: 0.10.0
libtpu: 0.0.40
codegen_flags: <defaults>
</compile_context>

<pallas_src>
import math
from functools import partial

import jax
import jax.numpy as jnp
from jax.experimental import pallas as pl
from jax.experimental.pallas import tpu as pltpu

NEG_INF = -1e30  # finite "minus infinity" (avoids NaN from exp(-inf - -inf))


def _layernorm(x, gamma, beta, eps=1e-5):
    mu = jnp.mean(x, axis=-1, keepdims=True)
    var = jnp.mean(jnp.square(x - mu), axis=-1, keepdims=True)
    return (x - mu) * jax.lax.rsqrt(var + eps) * gamma + beta


def _vmem_capacity_bytes():
    try:
        return int(pltpu.get_tpu_info().vmem_capacity_bytes)
    except Exception:
        return 64 << 20  # conservative default = v7x per-TC VMEM


def _pick_tile(n, cap, mult=8):
    """Largest divisor of n that is <= cap and a multiple of `mult` (else n)."""
    for d in range(min(n, cap), 0, -1):
        if n % d == 0 and (d % mult == 0 or d == n):
            return d
    return n


def _const_spec(shape):
    """BlockSpec for a grid-invariant operand; single-buffered when supported."""
    index_map = lambda *_: (0,) * len(shape)
    try:
        return pl.BlockSpec(shape, index_map, pipeline_mode=pl.Buffered(1))
    except (TypeError, AttributeError):
        return pl.BlockSpec(shape, index_map)


# --------------------- Kernel A: LN1 + QKV (head-major out) ------------------

def ln_qkv_kernel(x_ref, g1_ref, b1_ref, wqkv_ref, bqkv_ref,
                  h1_ref, q_ref, k_ref, v_ref, *, n_head, hd):
    x = x_ref[0]                                              # (tr, C) f32
    h1 = _layernorm(x, g1_ref[0], b1_ref[0])                  # f32
    qkv = jnp.dot(h1.astype(wqkv_ref.dtype), wqkv_ref[...],
                  preferred_element_type=jnp.float32) + bqkv_ref[0]
    h1_ref[0] = h1.astype(h1_ref.dtype)                       # bf16 hand-off
    qkv = qkv.astype(q_ref.dtype)                             # bf16
    C = n_head * hd
    # Head-major writeback so the wrapper needs no host-side q/k/v transposes.
    for h in range(n_head):                                   # static, unrolled
        q_ref[0, h] = qkv[:, h * hd:(h + 1) * hd]
        k_ref[0, h] = qkv[:, C + h * hd:C + (h + 1) * hd]
        v_ref[0, h] = qkv[:, 2 * C + h * hd:2 * C + (h + 1) * hd]


# ---------- Kernel B: flash attention + c_proj + residual (-> h2) ------------

def flash_attn_kernel(h1_ref, q_ref, k_ref, v_ref, wpa_ref, bpa_ref,
                      h2_ref, m_scr, l_scr, acc_scr, *, tile, scale):
    qi = pl.program_id(1)
    kj = pl.program_id(2)

    @pl.when(kj == 0)
    def _init():
        m_scr[...] = jnp.full(m_scr.shape, NEG_INF, m_scr.dtype)
        l_scr[...] = jnp.zeros_like(l_scr)
        acc_scr[...] = jnp.zeros_like(acc_scr)

    def _update(masked):
        q = q_ref[0]                                          # (H, tile, hd) bf16
        k = k_ref[0]
        v = v_ref[0]
        # All heads in one batched matmul; contraction over hd (no .T needed).
        s = jnp.einsum('hqd,hkd->hqk', q, k,
                       preferred_element_type=jnp.float32) * scale
        if masked:  # only the diagonal-straddling tile pays for the mask
            rows = qi * tile + jax.lax.broadcasted_iota(jnp.int32, (tile, tile), 0)
            cols = kj * tile + jax.lax.broadcasted_iota(jnp.int32, (tile, tile), 1)
            s = jnp.where((rows >= cols)[None], s, NEG_INF)
        m_prev = m_scr[...]
        m_new = jnp.maximum(m_prev, jnp.max(s, axis=-1, keepdims=True))
        alpha = jnp.exp(m_prev - m_new)
        p = jnp.exp(s - m_new)                                # f32 (H, tile, tile)
        l_scr[...] = alpha * l_scr[...] + jnp.sum(p, axis=-1, keepdims=True)
        pv = jnp.einsum('hqk,hkd->hqd', p.astype(v.dtype), v,
                        preferred_element_type=jnp.float32)   # (H, tile, hd)
        acc_scr[...] = alpha * acc_scr[...] + pv
        m_scr[...] = m_new

    # Fully-visible tiles skip masking; tiles above the diagonal are skipped
    # entirely (and the clamped k/v index_map means no DMA was issued either).
    @pl.when(kj < qi)
    def _below_diag():
        _update(False)

    @pl.when(kj == qi)
    def _on_diag():
        _update(True)

    @pl.when(kj == pl.num_programs(2) - 1)
    def _finalize():
        # Exact softmax normalisation: runs once per (b, qi) tile -> negligible.
        o = acc_scr[...] / l_scr[...]                         # (H, tile, hd) f32
        # c_proj as batched per-head matmul + head-sum: avoids an in-kernel
        # lane-dim relayout of the attention output.
        # TODO(synk): on v6e/v7x a single (tile,C)x(C,C) matmul after one
        # (H,tile,hd)->(tile,H*hd) relayout would use the full 256-deep MXU.
        proj = jnp.einsum('hqd,hdc->hqc', o.astype(wpa_ref.dtype), wpa_ref[...],
                          preferred_element_type=jnp.float32)
        attn = jnp.sum(proj, axis=0) + bpa_ref[0]             # (tile, C)
        h2 = h1_ref[0].astype(jnp.float32) + attn             # post-LN1 residual
        h2_ref[0] = h2.astype(h2_ref.dtype)


# --------- Kernel C: LN2 + MLP (+ residual), hidden dimension streamed -------

def ln_mlp_kernel(h2_ref, g2_ref, b2_ref, wfc_ref, bfc_ref, wpm_ref, bpm_ref,
                  out_ref, h3_scr, acc_scr):
    hc = pl.program_id(1)

    @pl.when(hc == 0)
    def _init():
        h3_scr[...] = _layernorm(h2_ref[...].astype(jnp.float32),
                                 g2_ref[0], b2_ref[0])
        acc_scr[...] = jnp.zeros_like(acc_scr)

    f = jnp.dot(h3_scr[...].astype(wfc_ref.dtype), wfc_ref[...],
                preferred_element_type=jnp.float32) + bfc_ref[0]
    f = jax.nn.gelu(f, approximate=False)                     # exact (erf) GELU
    acc_scr[...] += jnp.dot(f.astype(wpm_ref.dtype), wpm_ref[...],
                            preferred_element_type=jnp.float32)

    @pl.when(hc == pl.num_programs(1) - 1)
    def _finalize():
        out_ref[...] = (h3_scr[...] + acc_scr[...] + bpm_ref[0]).astype(out_ref.dtype)


# ------------------------------- wrapper -------------------------------------

def gpt_block(x, params, n_head):
    (g1, b1, wqkv, bqkv, wpa, bpa, g2, b2, wfc, bfc, wpm, bpm) = params
    B, T, C = x.shape
    hd = C // n_head
    bf16 = jnp.bfloat16

    vmem_cap = _vmem_capacity_bytes()
    usable = vmem_cap - (8 << 20)        # headroom for Mosaic internal scratch

    # ------------------ Kernel A: LN1 + QKV, head-major q/k/v ----------------
    tr = _pick_tile(T, 512)
    wqkv_bf = wqkv.astype(bf16)
    # TODO(synk): for very large C on v7x the (C,3C) QKV weight should also be
    # streamed over an output-chunk axis instead of being fully resident.
    fp_a = 2 * (tr * C * (4 + 2 + 3 * 2)) + 6 * C * C * 2 + 32 * C
    vmem_a = int(min(usable, max(32 << 20, 2 * fp_a + (4 << 20))))

    cost_a = pl.CostEstimate(
        flops=int(2 * B * T * C * 3 * C), transcendentals=0,
        bytes_accessed=int(B * T * C * (4 + 2 + 3 * 2) + 6 * C * C + 32 * C))

    kernel_a = partial(ln_qkv_kernel, n_head=n_head, hd=hd)
    h1, q, k, v = pl.pallas_call(
        kernel_a,
        out_shape=(jax.ShapeDtypeStruct((B, T, C), bf16),
                   jax.ShapeDtypeStruct((B, n_head, T, hd), bf16),
                   jax.ShapeDtypeStruct((B, n_head, T, hd), bf16),
                   jax.ShapeDtypeStruct((B, n_head, T, hd), bf16)),
        grid_spec=pltpu.PrefetchScalarGridSpec(
            num_scalar_prefetch=0,
            grid=(B, T // tr),
            in_specs=[
                pl.BlockSpec((1, tr, C), lambda b, t: (b, t, 0)),   # x rows
                _const_spec((1, C)), _const_spec((1, C)),           # ln1 g, b
                _const_spec((C, 3 * C)),                            # c_attn W
                _const_spec((1, 3 * C)),                            # c_attn b
            ],
            out_specs=[
                pl.BlockSpec((1, tr, C), lambda b, t: (b, t, 0)),            # h1
                pl.BlockSpec((1, n_head, tr, hd), lambda b, t: (b, 0, t, 0)),  # q
                pl.BlockSpec((1, n_head, tr, hd), lambda b, t: (b, 0, t, 0)),  # k
                pl.BlockSpec((1, n_head, tr, hd), lambda b, t: (b, 0, t, 0)),  # v
            ]),
        compiler_params=pltpu.CompilerParams(
            dimension_semantics=("parallel", "parallel"),
            vmem_limit_bytes=vmem_a),
        cost_estimate=cost_a,
    )(x, g1, b1, wqkv_bf, bqkv)

    # ---------- Kernel B: flash attention + c_proj + residual (-> h2) --------
    scale = 1.0 / math.sqrt(hd)

    def fp_b(t):
        blocks = 5 * t * C * 2               # h1, q, k, v, h2 blocks (bf16)
        scratch = n_head * t * (hd + 2) * 4
        weights = C * C * 2 + C * 4
        return 2 * blocks + scratch + 2 * weights

    t_attn = _pick_tile(T, 256)              # 256 fills the v6e/v7x MXU depth
    for _ in range(6):                       # shrink until it fits the budget
        if fp_b(t_attn) <= usable or t_attn <= 8:
            break
        smaller = _pick_tile(T, t_attn // 2)
        if smaller >= t_attn:
            break
        t_attn = smaller
    n_t = T // t_attn

    wpa_r = wpa.reshape(n_head, hd, C).astype(bf16)           # per-head c_proj
    vmem_b = int(min(usable, max(32 << 20, 2 * fp_b(t_attn) + (4 << 20))))

    cost_b = pl.CostEstimate(
        flops=int(B * (4 * n_head * T * T * hd + 2 * T * C * C)),
        transcendentals=int(B * n_head * T * T),
        bytes_accessed=int(B * T * C * 2 * 5 + C * C * 2))

    kernel_b = partial(flash_attn_kernel, tile=t_attn, scale=scale)

    h2 = pl.pallas_call(
        kernel_b,
        out_shape=jax.ShapeDtypeStruct((B, T, C), bf16),
        grid_spec=pltpu.PrefetchScalarGridSpec(
            num_scalar_prefetch=0,
            grid=(B, n_t, n_t),
            in_specs=[
                pl.BlockSpec((1, t_attn, C), lambda b, qi, kj: (b, qi, 0)),    # h1
                pl.BlockSpec((1, n_head, t_attn, hd),
                             lambda b, qi, kj: (b, 0, qi, 0)),                 # q
                # Causal clamp: kv tiles above the diagonal re-reference the
                # already-resident block -> no DMA for skipped (qi, kj) pairs.
                pl.BlockSpec((1, n_head, t_attn, hd),
                             lambda b, qi, kj: (b, 0, jnp.minimum(kj, qi), 0)),  # k
                pl.BlockSpec((1, n_head, t_attn, hd),
                             lambda b, qi, kj: (b, 0, jnp.minimum(kj, qi), 0)),  # v
                _const_spec((n_head, hd, C)),                  # attn c_proj W
                _const_spec((1, C)),                           # attn c_proj b
            ],
            out_specs=pl.BlockSpec((1, t_attn, C), lambda b, qi, kj: (b, qi, 0)),
            scratch_shapes=[
                pltpu.VMEM((n_head, t_attn, 1), jnp.float32),   # running max
                pltpu.VMEM((n_head, t_attn, 1), jnp.float32),   # running denom
                pltpu.VMEM((n_head, t_attn, hd), jnp.float32),  # output accum
            ]),
        compiler_params=pltpu.CompilerParams(
            dimension_semantics=("parallel", "parallel", "arbitrary"),
            vmem_limit_bytes=vmem_b),
        cost_estimate=cost_b,
    )(h1, q, k, v, wpa_r, bpa)
    # TODO(synk): for very long T, replace the rectangular (n_t, n_t) kv grid
    # with a 1-D lower-triangular grid (PrefetchScalarGridSpec + prefetched
    # (qi, kj) tables) so skipped grid steps are never iterated at all.

    # -------- Kernel C: LN2 + MLP (+ residual), 4C hidden dim streamed -------
    BT = B * T
    h2f = h2.reshape(BT, C)                  # metadata-only reshape
    wfc_bf = wfc.astype(bf16)
    wpm_bf = wpm.astype(bf16)

    tr2 = _pick_tile(BT, 512)
    th = _pick_tile(4 * C, 2048, mult=128)   # hidden (lane) chunk

    def fp_c(t, h):
        blocks = t * C * 2 + C * h * 2 + h * 4 + h * C * 2 + t * C * 4
        scratch = 2 * t * C * 4
        return 2 * blocks + scratch + 4 * C * 4

    for _ in range(10):                      # shrink until it fits the budget
        if fp_c(tr2, th) <= usable:
            break
        if th > 128:
            th = _pick_tile(4 * C, th // 2, mult=128)
        elif tr2 > 8:
            smaller = _pick_tile(BT, tr2 // 2)
            if smaller >= tr2:
                break
            tr2 = smaller
        else:
            break

    vmem_c = int(min(usable, max(32 << 20, 2 * fp_c(tr2, th) + (4 << 20))))

    cost_c = pl.CostEstimate(
        flops=int(16 * BT * C * C),
        transcendentals=int(BT * 4 * C),
        bytes_accessed=int(BT * C * (2 + 4) + 8 * C * C * 2 + 24 * C))

    out = pl.pallas_call(
        ln_mlp_kernel,
        out_shape=jax.ShapeDtypeStruct((BT, C), x.dtype),
        grid_spec=pltpu.PrefetchScalarGridSpec(
            num_scalar_prefetch=0,
            grid=(BT // tr2, 4 * C // th),
            in_specs=[
                pl.BlockSpec((tr2, C), lambda r, h: (r, 0)),   # h2 rows (resident)
                _const_spec((1, C)), _const_spec((1, C)),      # ln2 gamma, beta
                pl.BlockSpec((C, th), lambda r, h: (0, h)),    # c_fc W chunk
                pl.BlockSpec((1, th), lambda r, h: (0, h)),    # c_fc b chunk
                pl.BlockSpec((th, C), lambda r, h: (h, 0)),    # mlp c_proj W chunk
                _const_spec((1, C)),                           # mlp c_proj b
            ],
            out_specs=pl.BlockSpec((tr2, C), lambda r, h: (r, 0)),
            scratch_shapes=[
                pltpu.VMEM((tr2, C), jnp.float32),   # h3 = LN2(h2)
                pltpu.VMEM((tr2, C), jnp.float32),   # MLP accumulator
            ]),
        compiler_params=pltpu.CompilerParams(
            dimension_semantics=("parallel", "arbitrary"),
            vmem_limit_bytes=vmem_c),
        cost_estimate=cost_c,
    )(h2f, g2, b2, wfc_bf, bfc, wpm_bf, bpm)

    return out.reshape(B, T, C)


# --------------------------- pure-JAX reference ------------------------------

def ref_block(x, params, n_head):
    (g1, b1, wqkv, bqkv, wpa, bpa, g2, b2, wfc, bfc, wpm, bpm) = params
    B, T, C = x.shape
    hd = C // n_head

    def ln(z, g, b):
        mu = z.mean(-1, keepdims=True)
        var = ((z - mu) ** 2).mean(-1, keepdims=True)
        return (z - mu) / jnp.sqrt(var + 1e-5) * g + b

    h1 = ln(x, g1, b1)
    qkv = h1 @ wqkv + bqkv
    q, k, v = jnp.split(qkv, 3, axis=-1)
    q = q.reshape(B, T, n_head, hd).transpose(0, 2, 1, 3)
    k = k.reshape(B, T, n_head, hd).transpose(0, 2, 1, 3)
    v = v.reshape(B, T, n_head, hd).transpose(0, 2, 1, 3)
    s = jnp.einsum("bhqd,bhkd->bhqk", q, k) / math.sqrt(hd)
    mask = jnp.tril(jnp.ones((T, T), bool))
    s = jnp.where(mask, s, -jnp.inf)
    p = jax.nn.softmax(s, axis=-1)
    a = jnp.einsum("bhqk,bhkd->bhqd", p, v).transpose(0, 2, 1, 3).reshape(B, T, C)
    a = a @ wpa + bpa
    h2 = h1 + a
    h3 = ln(h2, g2, b2)
    f = jax.nn.gelu(h3 @ wfc + bfc, approximate=False)
    return h3 + (f @ wpm + bpm)


# ---------------------------------- main --------------------------------------

if __name__ == "__main__":
    B, T, C, n_head = 2, 8, 32, 4   # small GPTConfig: seq_len=8, n_embd=32, n_head=4

    key = jax.random.PRNGKey(0)
    ks = jax.random.split(key, 16)
    f32 = jnp.float32

    x = jax.random.normal(ks[0], (B, T, C), f32)

    params = (
        1.0 + 0.1 * jax.random.normal(ks[1], (1, C), f32),        # ln1 gamma
        0.1 * jax.random.normal(ks[2], (1, C), f32),              # ln1 beta
        0.02 * jax.random.normal(ks[3], (C, 3 * C), f32),         # c_attn W (in,out)
        0.02 * jax.random.normal(ks[4], (1, 3 * C), f32),         # c_attn b
        0.02 * jax.random.normal(ks[5], (C, C), f32),             # attn c_proj W
        0.02 * jax.random.normal(ks[6], (1, C), f32),             # attn c_proj b
        1.0 + 0.1 * jax.random.normal(ks[7], (1, C), f32),        # ln2 gamma
        0.1 * jax.random.normal(ks[8], (1, C), f32),              # ln2 beta
        0.02 * jax.random.normal(ks[9], (C, 4 * C), f32),         # c_fc W
        0.02 * jax.random.normal(ks[10], (1, 4 * C), f32),        # c_fc b
        0.02 * jax.random.normal(ks[11], (4 * C, C), f32),        # mlp c_proj W
        0.02 * jax.random.normal(ks[12], (1, C), f32),            # mlp c_proj b
    )

    out = gpt_block(x, params, n_head)
    out = jax.block_until_ready(out)

    ref = ref_block(x, params, n_head)
    assert out.shape == (B, T, C)
    # bf16 matmul operands + bf16 inter-kernel hand-offs => loosened tolerance.
    err = jnp.max(jnp.abs(out - ref))
    assert jnp.allclose(out, ref, atol=3e-2, rtol=3e-2), \
        f"mismatch vs reference (max abs err {err})"

    print("KERNEL_OK")
</pallas_src>

<mosaic_0001>
module attributes {stable_mosaic.version = 11 : i64} {
  func.func @ln_qkv_kernel(%arg0: i32, %arg1: i32, %arg2: memref<1x8x32xf32, #tpu.memory_space<vmem>>, %arg3: memref<1x32xf32, #tpu.memory_space<vmem>>, %arg4: memref<1x32xf32, #tpu.memory_space<vmem>>, %arg5: memref<32x96xbf16, #tpu.memory_space<vmem>>, %arg6: memref<1x96xf32, #tpu.memory_space<vmem>>, %arg7: memref<1x8x32xbf16, #tpu.memory_space<vmem>>, %arg8: memref<1x4x8x8xbf16, #tpu.memory_space<vmem>>, %arg9: memref<1x4x8x8xbf16, #tpu.memory_space<vmem>>, %arg10: memref<1x4x8x8xbf16, #tpu.memory_space<vmem>>) attributes {dimension_semantics = [#tpu.dimension_semantics<parallel>, #tpu.dimension_semantics<parallel>], iteration_bounds = array<i64: 2, 1>, scalar_prefetch = 0 : i64, scratch_operands = 0 : i64, tpu.core_type = #tpu.core_type<tc>, window_params = [{transform_indices = @transform_0, window_bounds = array<i64: 1, 8, 32>}, {pipeline_mode = #tpu.pipeline_mode<synchronous>, transform_indices = @transform_1, window_bounds = array<i64: 1, 32>}, {pipeline_mode = #tpu.pipeline_mode<synchronous>, transform_indices = @transform_2, window_bounds = array<i64: 1, 32>}, {pipeline_mode = #tpu.pipeline_mode<synchronous>, transform_indices = @transform_3, window_bounds = array<i64: 32, 96>}, {pipeline_mode = #tpu.pipeline_mode<synchronous>, transform_indices = @transform_4, window_bounds = array<i64: 1, 96>}, {transform_indices = @transform_5, window_bounds = array<i64: 1, 8, 32>}, {transform_indices = @transform_6, window_bounds = array<i64: 1, 4, 8, 8>}, {transform_indices = @transform_7, window_bounds = array<i64: 1, 4, 8, 8>}, {transform_indices = @transform_8, window_bounds = array<i64: 1, 4, 8, 8>}]} {
    %c0 = arith.constant 0 : index
    %c0_0 = arith.constant 0 : index
    %c0_1 = arith.constant 0 : index
    %0 = vector.load %arg2[%c0, %c0_0, %c0_1] : memref<1x8x32xf32, #tpu.memory_space<vmem>>, vector<1x8x32xf32>
    %1 = vector.shape_cast %0 : vector<1x8x32xf32> to vector<8x32xf32>
    %c0_2 = arith.constant 0 : index
    %c0_3 = arith.constant 0 : index
    %2 = vector.load %arg3[%c0_2, %c0_3] : memref<1x32xf32, #tpu.memory_space<vmem>>, vector<1x32xf32>
    %3 = vector.shape_cast %2 : vector<1x32xf32> to vector<32xf32>
    %c0_4 = arith.constant 0 : index
    %c0_5 = arith.constant 0 : index
    %4 = vector.load %arg4[%c0_4, %c0_5] : memref<1x32xf32, #tpu.memory_space<vmem>>, vector<1x32xf32>
    %5 = vector.shape_cast %4 : vector<1x32xf32> to vector<32xf32>
    %cst = arith.constant dense<0.000000e+00> : vector<8xf32>
    %6 = vector.multi_reduction <add>, %1, %cst [1] : vector<8x32xf32> to vector<8xf32>
    %7 = vector.shape_cast %6 : vector<8xf32> to vector<8x1xf32>
    %cst_6 = arith.constant 3.200000e+01 : f32
    %8 = vector.broadcast %cst_6 : f32 to vector<8x1xf32>
    %9 = arith.divf %7, %8 : vector<8x1xf32>
    %10 = vector.broadcast %9 : vector<8x1xf32> to vector<8x32xf32>
    %11 = arith.subf %1, %10 : vector<8x32xf32>
    %12 = arith.mulf %11, %11 : vector<8x32xf32>
    %cst_7 = arith.constant dense<0.000000e+00> : vector<8xf32>
    %13 = vector.multi_reduction <add>, %12, %cst_7 [1] : vector<8x32xf32> to vector<8xf32>
    %14 = vector.shape_cast %13 : vector<8xf32> to vector<8x1xf32>
    %cst_8 = arith.constant 3.200000e+01 : f32
    %15 = vector.broadcast %cst_8 : f32 to vector<8x1xf32>
    %16 = arith.divf %14, %15 : vector<8x1xf32>
    %17 = vector.broadcast %9 : vector<8x1xf32> to vector<8x32xf32>
    %18 = arith.subf %1, %17 : vector<8x32xf32>
    %cst_9 = arith.constant 9.99999974E-6 : f32
    %19 = vector.broadcast %cst_9 : f32 to vector<8x1xf32>
    %20 = arith.addf %16, %19 : vector<8x1xf32>
    %21 = math.rsqrt %20 : vector<8x1xf32>
    %22 = vector.broadcast %21 : vector<8x1xf32> to vector<8x32xf32>
    %23 = arith.mulf %18, %22 : vector<8x32xf32>
    %24 = vector.shape_cast %3 : vector<32xf32> to vector<1x32xf32>
    %25 = vector.broadcast %24 : vector<1x32xf32> to vector<8x32xf32>
    %26 = arith.mulf %23, %25 : vector<8x32xf32>
    %27 = vector.shape_cast %5 : vector<32xf32> to vector<1x32xf32>
    %28 = vector.broadcast %27 : vector<1x32xf32> to vector<8x32xf32>
    %29 = arith.addf %26, %28 : vector<8x32xf32>
    %30 = arith.truncf %29 : vector<8x32xf32> to vector<8x32xbf16>
    %c0_10 = arith.constant 0 : index
    %c0_11 = arith.constant 0 : index
    %31 = vector.load %arg5[%c0_10, %c0_11] : memref<32x96xbf16, #tpu.memory_space<vmem>>, vector<32x96xbf16>
    %cst_12 = arith.constant dense<0.000000e+00> : vector<8x96xf32>
    %32 = tpu.matmul %30, %31, %cst_12 {dimension_numbers = #tpu.dot_dimension_numbers<[1], [0], [0], [1], [0, 0, 1, 1], [], []>} : vector<8x32xbf16>, vector<32x96xbf16>, vector<8x96xf32> -> vector<8x96xf32>
    %c0_13 = arith.constant 0 : index
    %c0_14 = arith.constant 0 : index
    %33 = vector.load %arg6[%c0_13, %c0_14] : memref<1x96xf32, #tpu.memory_space<vmem>>, vector<1x96xf32>
    %34 = vector.shape_cast %33 : vector<1x96xf32> to vector<96xf32>
    %35 = vector.shape_cast %34 : vector<96xf32> to vector<1x96xf32>
    %36 = vector.broadcast %35 : vector<1x96xf32> to vector<8x96xf32>
    %37 = arith.addf %32, %36 : vector<8x96xf32>
    %38 = arith.truncf %29 : vector<8x32xf32> to vector<8x32xbf16>
    %c0_15 = arith.constant 0 : index
    %c0_16 = arith.constant 0 : index
    %c0_17 = arith.constant 0 : index
    %39 = vector.load %arg7[%c0_15, %c0_16, %c0_17] : memref<1x8x32xbf16, #tpu.memory_space<vmem>>, vector<1x8x32xbf16>
    %40 = vector.shape_cast %39 : vector<1x8x32xbf16> to vector<8x32xbf16>
    %41 = vector.shape_cast %38 : vector<8x32xbf16> to vector<1x8x32xbf16>
    tpu.vector_store %arg7[%c0_15, %c0_16, %c0_17], %41 {strides = array<i32>} : memref<1x8x32xbf16, #tpu.memory_space<vmem>>, vector<1x8x32xbf16>,
    %42 = arith.truncf %37 : vector<8x96xf32> to vector<8x96xbf16>
    %43 = vector.extract_strided_slice %42 {offsets = [0, 0], sizes = [8, 8], strides = [1, 1]} : vector<8x96xbf16> to vector<8x8xbf16>
    %c0_18 = arith.constant 0 : index
    %c0_19 = arith.constant 0 : index
    %c0_20 = arith.constant 0 : index
    %c0_21 = arith.constant 0 : index
    %44 = vector.load %arg8[%c0_18, %c0_19, %c0_20, %c0_21] : memref<1x4x8x8xbf16, #tpu.memory_space<vmem>>, vector<1x1x8x8xbf16>
    %45 = vector.shape_cast %44 : vector<1x1x8x8xbf16> to vector<8x8xbf16>
    %46 = vector.shape_cast %43 : vector<8x8xbf16> to vector<1x1x8x8xbf16>
    tpu.vector_store %arg8[%c0_18, %c0_19, %c0_20, %c0_21], %46 {strides = array<i32>} : memref<1x4x8x8xbf16, #tpu.memory_space<vmem>>, vector<1x1x8x8xbf16>,
    %47 = vector.extract_strided_slice %42 {offsets = [0, 32], sizes = [8, 8], strides = [1, 1]} : vector<8x96xbf16> to vector<8x8xbf16>
    %c0_22 = arith.constant 0 : index
    %c0_23 = arith.constant 0 : index
    %c0_24 = arith.constant 0 : index
    %c0_25 = arith.constant 0 : index
    %48 = vector.load %arg9[%c0_22, %c0_23, %c0_24, %c0_25] : memref<1x4x8x8xbf16, #tpu.memory_space<vmem>>, vector<1x1x8x8xbf16>
    %49 = vector.shape_cast %48 : vector<1x1x8x8xbf16> to vector<8x8xbf16>
    %50 = vector.shape_cast %47 : vector<8x8xbf16> to vector<1x1x8x8xbf16>
    tpu.vector_store %arg9[%c0_22, %c0_23, %c0_24, %c0_25], %50 {strides = array<i32>} : memref<1x4x8x8xbf16, #tpu.memory_space<vmem>>, vector<1x1x8x8xbf16>,
    %51 = vector.extract_strided_slice %42 {offsets = [0, 64], sizes = [8, 8], strides = [1, 1]} : vector<8x96xbf16> to vector<8x8xbf16>
    %c0_26 = arith.constant 0 : index
    %c0_27 = arith.constant 0 : index
    %c0_28 = arith.constant 0 : index
    %c0_29 = arith.constant 0 : index
    %52 = vector.load %arg10[%c0_26, %c0_27, %c0_28, %c0_29] : memref<1x4x8x8xbf16, #tpu.memory_space<vmem>>, vector<1x1x8x8xbf16>
    %53 = vector.shape_cast %52 : vector<1x1x8x8xbf16> to vector<8x8xbf16>
    %54 = vector.shape_cast %51 : vector<8x8xbf16> to vector<1x1x8x8xbf16>
    tpu.vector_store %arg10[%c0_26, %c0_27, %c0_28, %c0_29], %54 {strides = array<i32>} : memref<1x4x8x8xbf16, #tpu.memory_space<vmem>>, vector<1x1x8x8xbf16>,
    %55 = vector.extract_strided_slice %42 {offsets = [0, 8], sizes = [8, 8], strides = [1, 1]} : vector<8x96xbf16> to vector<8x8xbf16>
    %c0_30 = arith.constant 0 : index
    %c1 = arith.constant 1 : index
    %c0_31 = arith.constant 0 : index
    %c0_32 = arith.constant 0 : index
    %56 = vector.load %arg8[%c0_30, %c1, %c0_31, %c0_32] : memref<1x4x8x8xbf16, #tpu.memory_space<vmem>>, vector<1x1x8x8xbf16>
    %57 = vector.shape_cast %56 : vector<1x1x8x8xbf16> to vector<8x8xbf16>
    %58 = vector.shape_cast %55 : vector<8x8xbf16> to vector<1x1x8x8xbf16>
    tpu.vector_store %arg8[%c0_30, %c1, %c0_31, %c0_32], %58 {strides = array<i32>} : memref<1x4x8x8xbf16, #tpu.memory_space<vmem>>, vector<1x1x8x8xbf16>,
    %59 = vector.extract_strided_slice %42 {offsets = [0, 40], sizes = [8, 8], strides = [1, 1]} : vector<8x96xbf16> to vector<8x8xbf16>
    %c0_33 = arith.constant 0 : index
    %c1_34 = arith.constant 1 : index
    %c0_35 = arith.constant 0 : index
    %c0_36 = arith.constant 0 : index
    %60 = vector.load %arg9[%c0_33, %c1_34, %c0_35, %c0_36] : memref<1x4x8x8xbf16, #tpu.memory_space<vmem>>, vector<1x1x8x8xbf16>
    %61 = vector.shape_cast %60 : vector<1x1x8x8xbf16> to vector<8x8xbf16>
    %62 = vector.shape_cast %59 : vector<8x8xbf16> to vector<1x1x8x8xbf16>
    tpu.vector_store %arg9[%c0_33, %c1_34, %c0_35, %c0_36], %62 {strides = array<i32>} : memref<1x4x8x8xbf16, #tpu.memory_space<vmem>>, vector<1x1x8x8xbf16>,
    %63 = vector.extract_strided_slice %42 {offsets = [0, 72], sizes = [8, 8], strides = [1, 1]} : vector<8x96xbf16> to vector<8x8xbf16>
    %c0_37 = arith.constant 0 : index
    %c1_38 = arith.constant 1 : index
    %c0_39 = arith.constant 0 : index
    %c0_40 = arith.constant 0 : index
    %64 = vector.load %arg10[%c0_37, %c1_38, %c0_39, %c0_40] : memref<1x4x8x8xbf16, #tpu.memory_space<vmem>>, vector<1x1x8x8xbf16>
    %65 = vector.shape_cast %64 : vector<1x1x8x8xbf16> to vector<8x8xbf16>
    %66 = vector.shape_cast %63 : vector<8x8xbf16> to vector<1x1x8x8xbf16>
    tpu.vector_store %arg10[%c0_37, %c1_38, %c0_39, %c0_40], %66 {strides = array<i32>} : memref<1x4x8x8xbf16, #tpu.memory_space<vmem>>, vector<1x1x8x8xbf16>,
    %67 = vector.extract_strided_slice %42 {offsets = [0, 16], sizes = [8, 8], strides = [1, 1]} : vector<8x96xbf16> to vector<8x8xbf16>
    %c0_41 = arith.constant 0 : index
    %c2 = arith.constant 2 : index
    %c0_42 = arith.constant 0 : index
    %c0_43 = arith.constant 0 : index
    %68 = vector.load %arg8[%c0_41, %c2, %c0_42, %c0_43] : memref<1x4x8x8xbf16, #tpu.memory_space<vmem>>, vector<1x1x8x8xbf16>
    %69 = vector.shape_cast %68 : vector<1x1x8x8xbf16> to vector<8x8xbf16>
    %70 = vector.shape_cast %67 : vector<8x8xbf16> to vector<1x1x8x8xbf16>
    tpu.vector_store %arg8[%c0_41, %c2, %c0_42, %c0_43], %70 {strides = array<i32>} : memref<1x4x8x8xbf16, #tpu.memory_space<vmem>>, vector<1x1x8x8xbf16>,
    %71 = vector.extract_strided_slice %42 {offsets = [0, 48], sizes = [8, 8], strides = [1, 1]} : vector<8x96xbf16> to vector<8x8xbf16>
    %c0_44 = arith.constant 0 : index
    %c2_45 = arith.constant 2 : index
    %c0_46 = arith.constant 0 : index
    %c0_47 = arith.constant 0 : index
    %72 = vector.load %arg9[%c0_44, %c2_45, %c0_46, %c0_47] : memref<1x4x8x8xbf16, #tpu.memory_space<vmem>>, vector<1x1x8x8xbf16>
    %73 = vector.shape_cast %72 : vector<1x1x8x8xbf16> to vector<8x8xbf16>
    %74 = vector.shape_cast %71 : vector<8x8xbf16> to vector<1x1x8x8xbf16>
    tpu.vector_store %arg9[%c0_44, %c2_45, %c0_46, %c0_47], %74 {strides = array<i32>} : memref<1x4x8x8xbf16, #tpu.memory_space<vmem>>, vector<1x1x8x8xbf16>,
    %75 = vector.extract_strided_slice %42 {offsets = [0, 80], sizes = [8, 8], strides = [1, 1]} : vector<8x96xbf16> to vector<8x8xbf16>
    %c0_48 = arith.constant 0 : index
    %c2_49 = arith.constant 2 : index
    %c0_50 = arith.constant 0 : index
    %c0_51 = arith.constant 0 : index
    %76 = vector.load %arg10[%c0_48, %c2_49, %c0_50, %c0_51] : memref<1x4x8x8xbf16, #tpu.memory_space<vmem>>, vector<1x1x8x8xbf16>
    %77 = vector.shape_cast %76 : vector<1x1x8x8xbf16> to vector<8x8xbf16>
    %78 = vector.shape_cast %75 : vector<8x8xbf16> to vector<1x1x8x8xbf16>
    tpu.vector_store %arg10[%c0_48, %c2_49, %c0_50, %c0_51], %78 {strides = array<i32>} : memref<1x4x8x8xbf16, #tpu.memory_space<vmem>>, vector<1x1x8x8xbf16>,
    %79 = vector.extract_strided_slice %42 {offsets = [0, 24], sizes = [8, 8], strides = [1, 1]} : vector<8x96xbf16> to vector<8x8xbf16>
    %c0_52 = arith.constant 0 : index
    %c3 = arith.constant 3 : index
    %c0_53 = arith.constant 0 : index
    %c0_54 = arith.constant 0 : index
    %80 = vector.load %arg8[%c0_52, %c3, %c0_53, %c0_54] : memref<1x4x8x8xbf16, #tpu.memory_space<vmem>>, vector<1x1x8x8xbf16>
    %81 = vector.shape_cast %80 : vector<1x1x8x8xbf16> to vector<8x8xbf16>
    %82 = vector.shape_cast %79 : vector<8x8xbf16> to vector<1x1x8x8xbf16>
    tpu.vector_store %arg8[%c0_52, %c3, %c0_53, %c0_54], %82 {strides = array<i32>} : memref<1x4x8x8xbf16, #tpu.memory_space<vmem>>, vector<1x1x8x8xbf16>,
    %83 = vector.extract_strided_slice %42 {offsets = [0, 56], sizes = [8, 8], strides = [1, 1]} : vector<8x96xbf16> to vector<8x8xbf16>
    %c0_55 = arith.constant 0 : index
    %c3_56 = arith.constant 3 : index
    %c0_57 = arith.constant 0 : index
    %c0_58 = arith.constant 0 : index
    %84 = vector.load %arg9[%c0_55, %c3_56, %c0_57, %c0_58] : memref<1x4x8x8xbf16, #tpu.memory_space<vmem>>, vector<1x1x8x8xbf16>
    %85 = vector.shape_cast %84 : vector<1x1x8x8xbf16> to vector<8x8xbf16>
    %86 = vector.shape_cast %83 : vector<8x8xbf16> to vector<1x1x8x8xbf16>
    tpu.vector_store %arg9[%c0_55, %c3_56, %c0_57, %c0_58], %86 {strides = array<i32>} : memref<1x4x8x8xbf16, #tpu.memory_space<vmem>>, vector<1x1x8x8xbf16>,
    %87 = vector.extract_strided_slice %42 {offsets = [0, 88], sizes = [8, 8], strides = [1, 1]} : vector<8x96xbf16> to vector<8x8xbf16>
    %c0_59 = arith.constant 0 : index
    %c3_60 = arith.constant 3 : index
    %c0_61 = arith.constant 0 : index
    %c0_62 = arith.constant 0 : index
    %88 = vector.load %arg10[%c0_59, %c3_60, %c0_61, %c0_62] : memref<1x4x8x8xbf16, #tpu.memory_space<vmem>>, vector<1x1x8x8xbf16>
    %89 = vector.shape_cast %88 : vector<1x1x8x8xbf16> to vector<8x8xbf16>
    %90 = vector.shape_cast %87 : vector<8x8xbf16> to vector<1x1x8x8xbf16>
    tpu.vector_store %arg10[%c0_59, %c3_60, %c0_61, %c0_62], %90 {strides = array<i32>} : memref<1x4x8x8xbf16, #tpu.memory_space<vmem>>, vector<1x1x8x8xbf16>,
    return
  }
  func.func @transform_0(%arg0: i32, %arg1: i32) -> (i32, i32, i32) {
    %c0_i32 = arith.constant 0 : i32
    %c0_i32_0 = arith.constant 0 : i32
    return %arg0, %arg1, %c0_i32 : i32, i32, i32
  }
  func.func @transform_1(%arg0: i32, %arg1: i32) -> (i32, i32) {
    %c0_i32 = arith.constant 0 : i32
    %c0_i32_0 = arith.constant 0 : i32
    %c0_i32_1 = arith.constant 0 : i32
    return %c0_i32, %c0_i32_0 : i32, i32
  }
  func.func @transform_2(%arg0: i32, %arg1: i32) -> (i32, i32) {
    %c0_i32 = arith.constant 0 : i32
    %c0_i32_0 = arith.constant 0 : i32
    %c0_i32_1 = arith.constant 0 : i32
    return %c0_i32, %c0_i32_0 : i32, i32
  }
  func.func @transform_3(%arg0: i32, %arg1: i32) -> (i32, i32) {
    %c0_i32 = arith.constant 0 : i32
    %c0_i32_0 = arith.constant 0 : i32
    %c0_i32_1 = arith.constant 0 : i32
    return %c0_i32, %c0_i32_0 : i32, i32
  }
  func.func @transform_4(%arg0: i32, %arg1: i32) -> (i32, i32) {
    %c0_i32 = arith.constant 0 : i32
    %c0_i32_0 = arith.constant 0 : i32
    %c0_i32_1 = arith.constant 0 : i32
    return %c0_i32, %c0_i32_0 : i32, i32
  }
  func.func @transform_5(%arg0: i32, %arg1: i32) -> (i32, i32, i32) {
    %c0_i32 = arith.constant 0 : i32
    %c0_i32_0 = arith.constant 0 : i32
    return %arg0, %arg1, %c0_i32 : i32, i32, i32
  }
  func.func @transform_6(%arg0: i32, %arg1: i32) -> (i32, i32, i32, i32) {
    %c0_i32 = arith.constant 0 : i32
    %c0_i32_0 = arith.constant 0 : i32
    %c0_i32_1 = arith.constant 0 : i32
    return %arg0, %c0_i32, %arg1, %c0_i32_0 : i32, i32, i32, i32
  }
  func.func @transform_7(%arg0: i32, %arg1: i32) -> (i32, i32, i32, i32) {
    %c0_i32 = arith.constant 0 : i32
    %c0_i32_0 = arith.constant 0 : i32
    %c0_i32_1 = arith.constant 0 : i32
    return %arg0, %c0_i32, %arg1, %c0_i32_0 : i32, i32, i32, i32
  }
  func.func @transform_8(%arg0: i32, %arg1: i32) -> (i32, i32, i32, i32) {
    %c0_i32 = arith.constant 0 : i32
    %c0_i32_0 = arith.constant 0 : i32
    %c0_i32_1 = arith.constant 0 : i32
    return %arg0, %c0_i32, %arg1, %c0_i32_0 : i32, i32, i32, i32
  }
}

</mosaic_0001>

<llo_original>
// kernel: tpu_custom_call.1
$region0: #{tpu_custom_call.1}
  #allocation0 [shape = 'u32[]', space=smem, size = 0x4, offset = 0x4, fixed_abs, tag = 'smem constant byte address 0x4 - core index']
  #allocation1 [shape = 'u32[144,128]{1,0:T(1,128)}', space=vmem, size = 0x12000, scoped, tag = 'internal scratch']
  %s0 = inlined_call_operand.hbm [shape: f32[2,8,32], index: 0, kind: input, shape index: {}]
  %s1 = inlined_call_operand.vmem [shape: f32[1,32], index: 1, kind: input, shape index: {}]
  %s2 = inlined_call_operand.vmem [shape: f32[1,32], index: 2, kind: input, shape index: {}]
  %s3 = inlined_call_operand.hbm [shape: bf16[32,96], index: 3, kind: input, shape index: {}]
  %s4 = inlined_call_operand.vmem [shape: f32[1,96], index: 4, kind: input, shape index: {}]
  %s5 = inlined_call_operand.hbm [shape: bf16[2,8,32], index: 5, kind: output, shape index: {0}]
  %s6 = inlined_call_operand.hbm [shape: bf16[2,4,8,8], index: 6, kind: output, shape index: {1}]
  %s7 = inlined_call_operand.hbm [shape: bf16[2,4,8,8], index: 7, kind: output, shape index: {2}]
  %s8 = inlined_call_operand.hbm [shape: bf16[2,4,8,8], index: 8, kind: output, shape index: {3}]
  %9 = xla_tuple %s5, %s6, %s7, %s8
  %s10 = sld [smem:[#allocation0]]
  $region85: #{tpu_custom_call.1} parent=0
    _
  %s12 = ssub.s32 1, %s10
  %s13 = scalar_select 0, %s12, %s10
  $region1: #{tpu_custom_call.1} parent=0
    #allocation2 [shape = 'u8[8192]{0}', space=vmem, size = 0x2000, scoped, tag = 'input window, operand 0']
    #allocation3 [shape = 's32[2]{0}', space=sflag, size = 0x8, scoped, tag = 'scoped memory for tpu_custom_call.1']
    #allocation4 [shape = 's32[2]{0}', space=sflag, size = 0x8, scoped, tag = 'scoped memory for tpu_custom_call.1']
    #allocation5 [shape = 'u8[8192]{0}', space=vmem, size = 0x2000, scoped, tag = 'input window, operand 3, single buffered']
    #allocation6 [shape = 's32[1]{0}', space=sflag, size = 0x4, scoped, tag = 'scoped memory for tpu_custom_call.1']
    #allocation7 [shape = 'u8[4096]{0}', space=vmem, size = 0x1000, scoped, tag = 'output window, operand 0']
    #allocation8 [shape = 'u8[16384]{0}', space=vmem, size = 0x4000, scoped, tag = 'output window, operand 1']
    #allocation9 [shape = 's32[2]{0}', space=sflag, size = 0x8, scoped, tag = 'scoped memory for tpu_custom_call.1']
    #allocation10 [shape = 'u8[16384]{0}', space=vmem, size = 0x4000, scoped, tag = 'output window, operand 2']
    #allocation11 [shape = 'u8[16384]{0}', space=vmem, size = 0x4000, scoped, tag = 'output window, operand 3']
    #allocation12 [shape = 's32[2]{0}', space=sflag, size = 0x8, scoped, tag = 'scoped memory for tpu_custom_call.1']
    %14 = vsyncpa [#allocation3], 0
    %s15 = scalar_lea.sflag [#allocation3], 1
    %16 = vsyncpa %s15, 0
    %17 = vsyncpa [#allocation6], 0
    %18 = vsyncpa [#allocation4], 0
    %s19 = scalar_lea.sflag [#allocation4], 1
    %20 = vsyncpa %s19, 0
    %21 = vsyncpa [#allocation9], 0
    %s22 = scalar_lea.sflag [#allocation9], 1
    %23 = vsyncpa %s22, 0
    %24 = vsyncpa [#allocation12], 0
    %s25 = scalar_lea.sflag [#allocation12], 1
    %26 = vsyncpa %s25, 0
    loop: start=0, step=1, limit=4
    $region2: #{tpu_custom_call.1} parent=1 // loop_pre_header
      _
    $region3: #{tpu_custom_call.1} parent=1 // loop_header
      %s28 = sphi 0, %s32
      %p29 = scmp.ge.s32.totalorder %s28, 4
      %s35 = sphi 0, %s47
      %s36 = sphi 0, %s43
      %s37 = sphi 0, %s35
      %s38 = sphi 0, %s36
      %s39 = sphi 0, %s37
      %s40 = sphi 0, %s38
      %s52 = sphi 0, %s54
      %s55 = sphi 0, %s52
      %s56 = sphi 0, %s55
      %s72 = sphi 0, %s56
      %s76 = sphi 0, %s76
      %s78 = sphi 0, %s76
      %s79 = sphi 0, %s78
      %s93 = sphi 0, %s79
      %s97 = sphi 0, %s97
      %s99 = sphi 0, %s97
      %s100 = sphi 0, %s99
      %s114 = sphi 0, %s100
      %s118 = sphi 0, %s118
      %s120 = sphi 0, %s118
      %s121 = sphi 0, %s120
      %s135 = sphi 0, %s121
      %s139 = sphi 0, %s139
      %s141 = sphi 0, %s139
      %s142 = sphi 0, %s141
      %s156 = sphi 0, %s142
      %s164 = sphi 0, %s166
      %s167 = sphi 0, %s164
      %s168 = sphi 0, %s167
      %s184 = sphi 0, %s168
      %s192 = sphi 0, %s194
      %s195 = sphi 0, %s192
      %s196 = sphi 0, %s195
      %s212 = sphi 0, %s196
      %s220 = sphi 0, %s222
      %s223 = sphi 0, %s220
      %s224 = sphi 0, %s223
      %s240 = sphi 0, %s224
      %s248 = sphi 0, %s250
      %s251 = sphi 0, %s248
      %s252 = sphi 0, %s251
      %s268 = sphi 0, %s252
    $region4: #{tpu_custom_call.1} parent=1 // loop_header_branch
      %31 = sbr.rel (%p29) target = $region8
    $region5: #{tpu_custom_call.1} parent=1 // loop_body
      %s33 = ssub.s32 %s28, 1
      %s34 = ssub.s32 %s28, 2
      %s41 = sadd.s32 1, %s36
      %p42 = scmp.ge.s32.totalorder %s41, 1
      %s43 = scalar_select %p42, 0, %s41
      %s44 = sadd.s32 1, %s35
      %s45 = scalar_select %p42, %s44, %s35
      %p46 = scmp.ge.s32.totalorder %s45, 2
      %s47 = scalar_select %p46, 0, %s45
      %s48 = ssub.s32 %s35, %s47
      %s49 = ssub.s32 %s36, %s43
      %s50 = sor.u32 %s48, %s49
      %p51 = scmp.eq.s32.totalorder %s50, 0
      %s53 = sadd.s32 %s52, 1
      %s54 = scalar_select %p51, %s52, %s53
      %p57 = pneg %p51
      %p58 = scmp.eq.s32.totalorder %s28, 1
      %p59 = por %p57, %p58
      %p60 = scmp.ne.s32.totalorder %s52, %s55
      %p61 = scmp.eq.s32.totalorder %s28, 0
      %p62 = por %p60, %p61
      %p63 = scmp.ne.s32.totalorder %s52, %s55
      %p64 = scmp.eq.s32.totalorder %s33, 1
      %p65 = por %p63, %p64
      %p66 = scmp.ne.s32.totalorder %s55, %s56
      %p67 = scmp.eq.s32.totalorder %s33, 0
      %p68 = por %p66, %p67
      %p69 = scmp.ne.s32.totalorder %s55, %s56
      %p70 = scmp.eq.s32.totalorder %s34, 1
      %p71 = por %p69, %p70
      %p73 = scmp.ne.s32.totalorder %s56, %s72
      %p74 = scmp.eq.s32.totalorder %s34, 0
      %p75 = por %p73, %p74
      %s77 = sadd.s32 %s76, 1
      %p80 = scmp.eq.s32.totalorder %s28, 1
      %p81 = scmp.ne.s32.totalorder %s76, %s78
      %p82 = scmp.eq.s32.totalorder %s28, 0
      %p83 = por %p81, %p82
      %p84 = scmp.ne.s32.totalorder %s76, %s78
      %p85 = scmp.eq.s32.totalorder %s33, 1
      %p86 = por %p84, %p85
      %p87 = scmp.ne.s32.totalorder %s78, %s79
      %p88 = scmp.eq.s32.totalorder %s33, 0
      %p89 = por %p87, %p88
      %p90 = scmp.ne.s32.totalorder %s78, %s79
      %p91 = scmp.eq.s32.totalorder %s34, 1
      %p92 = por %p90, %p91
      %p94 = scmp.ne.s32.totalorder %s79, %s93
      %p95 = scmp.eq.s32.totalorder %s34, 0
      %p96 = por %p94, %p95
      %s98 = sadd.s32 %s97, 1
      %p101 = scmp.eq.s32.totalorder %s28, 1
      %p102 = scmp.ne.s32.totalorder %s97, %s99
      %p103 = scmp.eq.s32.totalorder %s28, 0
      %p104 = por %p102, %p103
      %p105 = scmp.ne.s32.totalorder %s97, %s99
      %p106 = scmp.eq.s32.totalorder %s33, 1
      %p107 = por %p105, %p106
      %p108 = scmp.ne.s32.totalorder %s99, %s100
      %p109 = scmp.eq.s32.totalorder %s33, 0
      %p110 = por %p108, %p109
      %p111 = scmp.ne.s32.totalorder %s99, %s100
      %p112 = scmp.eq.s32.totalorder %s34, 1
      %p113 = por %p111, %p112
      %p115 = scmp.ne.s32.totalorder %s100, %s114
      %p116 = scmp.eq.s32.totalorder %s34, 0
      %p117 = por %p115, %p116
      %s119 = sadd.s32 %s118, 1
      %p122 = scmp.eq.s32.totalorder %s28, 1
      %p123 = scmp.ne.s32.totalorder %s118, %s120
      %p124 = scmp.eq.s32.totalorder %s28, 0
      %p125 = por %p123, %p124
      %p126 = scmp.ne.s32.totalorder %s118, %s120
      %p127 = scmp.eq.s32.totalorder %s33, 1
      %p128 = por %p126, %p127
      %p129 = scmp.ne.s32.totalorder %s120, %s121
      %p130 = scmp.eq.s32.totalorder %s33, 0
      %p131 = por %p129, %p130
      %p132 = scmp.ne.s32.totalorder %s120, %s121
      %p133 = scmp.eq.s32.totalorder %s34, 1
      %p134 = por %p132, %p133
      %p136 = scmp.ne.s32.totalorder %s121, %s135
      %p137 = scmp.eq.s32.totalorder %s34, 0
      %p138 = por %p136, %p137
      %s140 = sadd.s32 %s139, 1
      %p143 = scmp.eq.s32.totalorder %s28, 1
      %p144 = scmp.ne.s32.totalorder %s139, %s141
      %p145 = scmp.eq.s32.totalorder %s28, 0
      %p146 = por %p144, %p145
      %p147 = scmp.ne.s32.totalorder %s139, %s141
      %p148 = scmp.eq.s32.totalorder %s33, 1
      %p149 = por %p147, %p148
      %p150 = scmp.ne.s32.totalorder %s141, %s142
      %p151 = scmp.eq.s32.totalorder %s33, 0
      %p152 = por %p150, %p151
      %p153 = scmp.ne.s32.totalorder %s141, %s142
      %p154 = scmp.eq.s32.totalorder %s34, 1
      %p155 = por %p153, %p154
      %p157 = scmp.ne.s32.totalorder %s142, %s156
      %p158 = scmp.eq.s32.totalorder %s34, 0
      %p159 = por %p157, %p158
      %s160 = ssub.s32 %s35, %s47
      %s161 = ssub.s32 %s36, %s43
      %s162 = sor.u32 %s160, %s161
      %p163 = scmp.eq.s32.totalorder %s162, 0
      %s165 = sadd.s32 %s164, 1
      %s166 = scalar_select %p163, %s164, %s165
      %p169 = pneg %p163
      %p170 = scmp.eq.s32.totalorder %s28, 1
      %p171 = por %p169, %p170
      %p172 = scmp.ne.s32.totalorder %s164, %s167
      %p173 = scmp.eq.s32.totalorder %s28, 0
      %p174 = por %p172, %p173
      %p175 = scmp.ne.s32.totalorder %s164, %s167
      %p176 = scmp.eq.s32.totalorder %s33, 1
      %p177 = por %p175, %p176
      %p178 = scmp.ne.s32.totalorder %s167, %s168
      %p179 = scmp.eq.s32.totalorder %s33, 0
      %p180 = por %p178, %p179
      %p181 = scmp.ne.s32.totalorder %s167, %s168
      %p182 = scmp.eq.s32.totalorder %s34, 1
      %p183 = por %p181, %p182
      %p185 = scmp.ne.s32.totalorder %s168, %s184
      %p186 = scmp.eq.s32.totalorder %s34, 0
      %p187 = por %p185, %p186
      %s188 = ssub.s32 %s35, %s47
      %s189 = ssub.s32 %s36, %s43
      %s190 = sor.u32 %s188, %s189
      %p191 = scmp.eq.s32.totalorder %s190, 0
      %s193 = sadd.s32 %s192, 1
      %s194 = scalar_select %p191, %s192, %s193
      %p197 = pneg %p191
      %p198 = scmp.eq.s32.totalorder %s28, 1
      %p199 = por %p197, %p198
      %p200 = scmp.ne.s32.totalorder %s192, %s195
      %p201 = scmp.eq.s32.totalorder %s28, 0
      %p202 = por %p200, %p201
      %p203 = scmp.ne.s32.totalorder %s192, %s195
      %p204 = scmp.eq.s32.totalorder %s33, 1
      %p205 = por %p203, %p204
      %p206 = scmp.ne.s32.totalorder %s195, %s196
      %p207 = scmp.eq.s32.totalorder %s33, 0
      %p208 = por %p206, %p207
      %p209 = scmp.ne.s32.totalorder %s195, %s196
      %p210 = scmp.eq.s32.totalorder %s34, 1
      %p211 = por %p209, %p210
      %p213 = scmp.ne.s32.totalorder %s196, %s212
      %p214 = scmp.eq.s32.totalorder %s34, 0
      %p215 = por %p213, %p214
      %s216 = ssub.s32 %s35, %s47
      %s217 = ssub.s32 %s36, %s43
      %s218 = sor.u32 %s216, %s217
      %p219 = scmp.eq.s32.totalorder %s218, 0
      %s221 = sadd.s32 %s220, 1
      %s222 = scalar_select %p219, %s220, %s221
      %p225 = pneg %p219
      %p226 = scmp.eq.s32.totalorder %s28, 1
      %p227 = por %p225, %p226
      %p228 = scmp.ne.s32.totalorder %s220, %s223
      %p229 = scmp.eq.s32.totalorder %s28, 0
      %p230 = por %p228, %p229
      %p231 = scmp.ne.s32.totalorder %s220, %s223
      %p232 = scmp.eq.s32.totalorder %s33, 1
      %p233 = por %p231, %p232
      %p234 = scmp.ne.s32.totalorder %s223, %s224
      %p235 = scmp.eq.s32.totalorder %s33, 0
      %p236 = por %p234, %p235
      %p237 = scmp.ne.s32.totalorder %s223, %s224
      %p238 = scmp.eq.s32.totalorder %s34, 1
      %p239 = por %p237, %p238
      %p241 = scmp.ne.s32.totalorder %s224, %s240
      %p242 = scmp.eq.s32.totalorder %s34, 0
      %p243 = por %p241, %p242
      %s244 = ssub.s32 %s35, %s47
      %s245 = ssub.s32 %s36, %s43
      %s246 = sor.u32 %s244, %s245
      %p247 = scmp.eq.s32.totalorder %s246, 0
      %s249 = sadd.s32 %s248, 1
      %s250 = scalar_select %p247, %s248, %s249
      %p253 = pneg %p247
      %p254 = scmp.eq.s32.totalorder %s28, 1
      %p255 = por %p253, %p254
      %p256 = scmp.ne.s32.totalorder %s248, %s251
      %p257 = scmp.eq.s32.totalorder %s28, 0
      %p258 = por %p256, %p257
      %p259 = scmp.ne.s32.totalorder %s248, %s251
      %p260 = scmp.eq.s32.totalorder %s33, 1
      %p261 = por %p259, %p260
      %p262 = scmp.ne.s32.totalorder %s251, %s252
      %p263 = scmp.eq.s32.totalorder %s33, 0
      %p264 = por %p262, %p263
      %p265 = scmp.ne.s32.totalorder %s251, %s252
      %p266 = scmp.eq.s32.totalorder %s34, 1
      %p267 = por %p265, %p266
      %p269 = scmp.ne.s32.totalorder %s252, %s268
      %p270 = scmp.eq.s32.totalorder %s34, 0
      %p271 = por %p269, %p270
      %p272 = scmp.le.s32.totalorder 1, %s28
      %p273 = scmp.lt.s32.totalorder %s28, 3
      %p274 = pnand %p272, %p273
      %p275 = pneg %p274
      // Predicated region
      $region9: #{tpu_custom_call.1} parent=5 // pred_check
        _
      $region10: #{tpu_custom_call.1} parent=5 // pred_check_branch
        %277 = sbr.rel (%p274) target = $region12
      $region11: #{tpu_custom_call.1} parent=5 // pred_region
        %s278 = ssub.s32 %s28, 1
        // Predicated region
        $region13: #{tpu_custom_call.1} parent=11 // pred_check
          %p279 = pneg %p89
        $region14: #{tpu_custom_call.1} parent=11 // pred_check_branch
          %281 = sbr.rel (%p279) target = $region16
        $region15: #{tpu_custom_call.1} parent=11 // pred_region
          _
        $region16: #{tpu_custom_call.1} parent=11 // pred_fallthru
          _
        // Predicated region
        $region17: #{tpu_custom_call.1} parent=11 // pred_check
          %p282 = pneg %p110
        $region18: #{tpu_custom_call.1} parent=11 // pred_check_branch
          %284 = sbr.rel (%p282) target = $region20
        $region19: #{tpu_custom_call.1} parent=11 // pred_region
          _
        $region20: #{tpu_custom_call.1} parent=11 // pred_fallthru
          _
        // Predicated region
        $region21: #{tpu_custom_call.1} parent=11 // pred_check
          %p285 = pneg %p131
        $region22: #{tpu_custom_call.1} parent=11 // pred_check_branch
          %287 = sbr.rel (%p285) target = $region24
        $region23: #{tpu_custom_call.1} parent=11 // pred_region
          %s289 = ssub.s32 256, 256
          %290 = vsyncadd [#allocation6], %s289
          %s291 = sshll.u32 [#allocation5], 4
          %s292 = int_to_ptr.vmem [resolvable:$true] %s291
          %297 = dma.hbm_to_vmem [thread:$0]  %s3, 256, %s292, [#allocation6], 64, 64, 4
        $region24: #{tpu_custom_call.1} parent=11 // pred_fallthru
          _
        // Predicated region
        $region25: #{tpu_custom_call.1} parent=11 // pred_check
          %p298 = pneg %p152
        $region26: #{tpu_custom_call.1} parent=11 // pred_check_branch
          %300 = sbr.rel (%p298) target = $region28
        $region27: #{tpu_custom_call.1} parent=11 // pred_region
          _
        $region28: #{tpu_custom_call.1} parent=11 // pred_fallthru
          _
      $region12: #{tpu_custom_call.1} parent=5 // pred_fallthru
        _
      %p301 = scmp.lt.s32.totalorder %s28, 2
      // Predicated region
      $region29: #{tpu_custom_call.1} parent=5 // pred_check
        %p302 = pneg %p301
      $region30: #{tpu_custom_call.1} parent=5 // pred_check_branch
        %304 = sbr.rel (%p302) target = $region32
      $region31: #{tpu_custom_call.1} parent=5 // pred_region
        // Predicated region
        $region33: #{tpu_custom_call.1} parent=31 // pred_check
          %p305 = pneg %p62
        $region34: #{tpu_custom_call.1} parent=31 // pred_check_branch
          %307 = sbr.rel (%p305) target = $region36
        $region35: #{tpu_custom_call.1} parent=31 // pred_region
          %s308 = sand.u32 %s52, 1
          %s309 = scalar_lea.sflag [#allocation3], %s308
          %s310 = sand.u32 %s52, 1
          %s311 = smul.addr %s310, 8
          %s312 = scalar_lea.vmem [#allocation2], %s311
          %s314 = ssub.s32 128, 128
          %315 = vsyncadd %s309, %s314
          %s316 = sadd.s32 %s36, %s35
          %s317 = smul.addr %s316, 128
          %s318 = scalar_lea.hbm %s0, %s317
          %s320 = sshll.u32 %s312, 4
          %s321 = int_to_ptr.vmem [resolvable:$true] %s320
          %323 = dma.hbm_to_vmem [thread:$0]  %s318, 128, %s321, %s309
        $region36: #{tpu_custom_call.1} parent=31 // pred_fallthru
          _
      $region32: #{tpu_custom_call.1} parent=5 // pred_fallthru
        _
      %p324 = scmp.le.s32.totalorder 1, %s28
      %p325 = scmp.lt.s32.totalorder %s28, 3
      %p326 = pnand %p324, %p325
      %p327 = pneg %p326
      // Predicated region
      $region37: #{tpu_custom_call.1} parent=5 // pred_check
        _
      $region38: #{tpu_custom_call.1} parent=5 // pred_check_branch
        %329 = sbr.rel (%p326) target = $region40
      $region39: #{tpu_custom_call.1} parent=5 // pred_region
        %s330 = ssub.s32 %s28, 1
        %s331 = sand.u32 %s55, 1
        %s332 = scalar_lea.sflag [#allocation3], %s331
        %s333 = sand.u32 %s55, 1
        %s334 = smul.addr %s333, 8
        %s335 = scalar_lea.vmem [#allocation2], %s334
        // Predicated region
        $region41: #{tpu_custom_call.1} parent=39 // pred_check
          %p336 = pneg %p68
        $region42: #{tpu_custom_call.1} parent=39 // pred_check_branch
          %338 = sbr.rel (%p336) target = $region44
        $region43: #{tpu_custom_call.1} parent=39 // pred_region
          %339 = dma.done %s332, 128
        $region44: #{tpu_custom_call.1} parent=39 // pred_fallthru
          _
        // Predicated region
        $region45: #{tpu_custom_call.1} parent=39 // pred_check
          %p340 = pneg %p131
        $region46: #{tpu_custom_call.1} parent=39 // pred_check_branch
          %342 = sbr.rel (%p340) target = $region48
        $region47: #{tpu_custom_call.1} parent=39 // pred_region
          %343 = dma.done [#allocation6], 256
        $region48: #{tpu_custom_call.1} parent=39 // pred_fallthru
          _
        %s344 = sand.u32 %s55, 1
        %s345 = scalar_lea.sflag [#allocation3], %s344
        %s346 = sand.u32 %s55, 1
        %s347 = smul.addr %s346, 8
        %s348 = scalar_lea.vmem [#allocation2], %s347
        %p349 = pneg %p68
        %p350 = pneg %p65
        %p351 = pneg %p89
        %p352 = pneg %p86
        %p353 = pneg %p110
        %p354 = pneg %p107
        %p355 = pneg %p131
        %p356 = pneg %p128
        %p357 = pneg %p152
        %p358 = pneg %p149
        %p359 = pneg %p180
        %p360 = pneg %p177
        %s361 = sand.u32 %s167, 1
        %s362 = scalar_lea.sflag [#allocation4], %s361
        %s363 = sand.u32 %s167, 1
        %s364 = smul.addr %s363, 4
        %s365 = scalar_lea.vmem [#allocation7], %s364
        %p366 = pneg %p208
        %p367 = pneg %p205
        %s368 = sand.u32 %s33, 1
        %s369 = scalar_lea.sflag [#allocation9], %s368
        %s370 = sand.u32 %s195, 1
        %s371 = smul.addr %s370, 16
        %s372 = scalar_lea.vmem [#allocation8], %s371
        %p373 = pneg %p236
        %p374 = pneg %p233
        %s375 = sand.u32 %s33, 1
        %s376 = scalar_lea.sflag [#allocation9], %s375
        %s377 = sand.u32 %s223, 1
        %s378 = smul.addr %s377, 16
        %s379 = scalar_lea.vmem [#allocation10], %s378
        %p380 = pneg %p264
        %p381 = pneg %p261
        %s382 = sand.u32 %s251, 1
        %s383 = scalar_lea.sflag [#allocation12], %s382
        %s384 = sand.u32 %s251, 1
        %s385 = smul.addr %s384, 16
        %s386 = scalar_lea.vmem [#allocation11], %s385
        %v388 = vld [vmem:[%s335] sm:$0xff]
        %v389 = vld [vmem:[%s1] sm:$0x1]
        %v390 = vld [vmem:[%s2] sm:$0x1]
        %vm391 = vcmask 261120
        %v392 = vsel %vm391, %v388, 0.0
        %393 = vadd.xlane.f32.xlu0 %v392
        %v394 = vpop.xlane.xlu0 %393
        %v395 = vrcp.pop 32.0
        %v396 = vmul.f32 %v394, %v395
        %v397 = vsub.f32 %v388, %v396
        %v398 = vmul.f32 %v397, %v397
        %v399 = vsel %vm391, %v398, 0.0
        %400 = vadd.xlane.f32.xlu0 %v399
        %v401 = vpop.xlane.xlu0 %400
        %v402 = vmul.f32 %v401, %v395
        %v403 = vadd.f32 %v402, 1e-05
        %v404 = vrsqrt.pop %v403
        %v405 = vmul.f32 %v397, %v404
        %v407 = vlaneseq
        %v408 = vshrl.u32 %v407, 7
        %v409 = vsub.s32 0, %v408
        %v410 = vrot.slane %v389, %v409
        %v412 = vmul.f32 %v405, %v410
        %v414 = vlaneseq
        %v415 = vshrl.u32 %v414, 7
        %v416 = vsub.s32 0, %v415
        %v417 = vrot.slane %v390, %v416
        %v419 = vadd.f32 %v412, %v417
        %v420 = vpack.c.bf16 %v419, %v419
        %v421 = vld [vmem:[#allocation5] sm:$0xf]
        %v422 = vld [vmem:[#allocation5 + $0x4] sm:$0xf]
        %v423 = vld [vmem:[#allocation5 + $0x8] sm:$0xf]
        %v424 = vld [vmem:[#allocation5 + $0xc] sm:$0xf]
        %v425 = vld [vmem:[%s4] sm:$0x1]
        %v427 = vlaneseq
        %v428 = vshrl.u32 %v427, 7
        %v429 = vsub.s32 0, %v428
        %v430 = vrot.slane %v425, %v429
        %v436 = vunpack.c.l.b16 %v421
        %v437 = vunpack.c.l.b16 %v422
        %v438 = vunpack.c.l.b16 %v423
        %v439 = vunpack.c.l.b16 %v424
        %v440 = vpack.c.b16 %v437, %v436
        %v441 = vpack.c.b16 %v439, %v438
        %v445 = vsel %vm391, %v420, 0
        %447 = vmatprep.subr.bf16.mxu0 0
        %448 = vmatpush1.bf16.msra.mxu0 0
        %449 = vmatprep.subr.bf16.mxu0 0
        %450 = vmatpush1.bf16.msra.mxu0 0
        %451 = vmatprep.subr.bf16.mxu0 0
        %452 = vmatpush1.bf16.msra.mxu0 0
        %453 = vmatprep.subr.bf16.mxu0 0
        %454 = vmatpush1.bf16.msra.mxu0 0
        %455 = vmatprep.subr.bf16.mxu0 0
        %456 = vmatpush1.bf16.msra.mxu0 0
        %457 = vmatprep.subr.bf16.mxu0 0
        %458 = vmatpush1.bf16.msra.mxu0 0
        %459 = vmatprep.subr.bf16.mxu0 0
        %460 = vmatpush1.bf16.msra.mxu0 %v441
        %461 = vmatprep.subr.bf16.mxu0 0
        %462 = vmatpush1.bf16.msra.mxu0 %v440
        %463 = vmatprep.subr.bf16.mxu0 0
        %464 = vmatpush2.bf16.msra.mxu0 0
        %465 = vmatprep.subr.bf16.mxu0 0
        %466 = vmatpush2.bf16.msra.mxu0 0
        %467 = vmatprep.subr.bf16.mxu0 0
        %468 = vmatpush2.bf16.msra.mxu0 0
        %469 = vmatprep.subr.bf16.mxu0 0
        %470 = vmatpush2.bf16.msra.mxu0 0
        %471 = vmatprep.subr.bf16.mxu0 0
        %472 = vmatpush2.bf16.msra.mxu0 0
        %473 = vmatprep.subr.bf16.mxu0 0
        %474 = vmatpush2.bf16.msra.mxu0 0
        %475 = vmatprep.subr.bf16.mxu0 0
        %476 = vmatpush2.bf16.msra.mxu0 0
        %477 = vmatprep.subr.bf16.mxu0 0
        %478 = vmatpush2.bf16.msra.mxu0 0
        %479 = vmatprep.mubr.bf16.mxu0 0
        %480 = vmatmul.mubr.bf16.gmra.mxu0 %v445
        %v481 = vpop.f32.mrf.mxu0
        %v482 = vadd.f32 %v430, %v481
        %v483 = vpop.f32.mrf.mxu0
        %v484 = vpop.f32.mrf.mxu0
        %v485 = vpop.f32.mrf.mxu0
        %486 = vdwg.mxu0
        %vm487 = vcmask 257024
        %488 = vst.msk [vmem:[%s365] sm:$0xf] %vm487, %v420
        %v489 = vpack.c.bf16 %v482, %v482
        %vm490 = vcmask 60416
        %491 = vst.msk [vmem:[%s372] sm:$0xf] %vm490, %v489
        %v493 = vunpack.c.l.b16 %v489
        %v494 = vpack.c.b16 %v493, %v493
        %495 = vrot.lane.b32.xlu0 %v494, 96
        %v496 = vpop.permute.xlu0 %495
        %498 = vst.msk [vmem:[%s379] sm:$0xf] %vm490, %v496
        %499 = vrot.lane.b32.xlu0 %v494, 64
        %v500 = vpop.permute.xlu0 %499
        %502 = vst.msk [vmem:[%s386] sm:$0xf] %vm490, %v500
        %503 = vrot.lane.b32.xlu0 %v494, 120
        %v504 = vpop.permute.xlu0 %503
        %s506 = scalar_lea.vmem %s372, 4 [#allocation8]
        %507 = vst.msk [vmem:[%s506] sm:$0xf] %vm490, %v504
        %508 = vrot.lane.b32.xlu0 %v494, 88
        %v509 = vpop.permute.xlu0 %508
        %s511 = scalar_lea.vmem %s379, 4 [#allocation10]
        %512 = vst.msk [vmem:[%s511] sm:$0xf] %vm490, %v509
        %513 = vrot.lane.b32.xlu0 %v494, 56
        %v514 = vpop.permute.xlu0 %513
        %s516 = scalar_lea.vmem %s386, 4 [#allocation11]
        %517 = vst.msk [vmem:[%s516] sm:$0xf] %vm490, %v514
        %518 = vrot.lane.b32.xlu0 %v494, 112
        %v519 = vpop.permute.xlu0 %518
        %s521 = scalar_lea.vmem %s372, 8 [#allocation8]
        %522 = vst.msk [vmem:[%s521] sm:$0xf] %vm490, %v519
        %523 = vrot.lane.b32.xlu0 %v494, 80
        %v524 = vpop.permute.xlu0 %523
        %s526 = scalar_lea.vmem %s379, 8 [#allocation10]
        %527 = vst.msk [vmem:[%s526] sm:$0xf] %vm490, %v524
        %528 = vrot.lane.b32.xlu0 %v494, 48
        %v529 = vpop.permute.xlu0 %528
        %s531 = scalar_lea.vmem %s386, 8 [#allocation11]
        %532 = vst.msk [vmem:[%s531] sm:$0xf] %vm490, %v529
        %533 = vrot.lane.b32.xlu0 %v494, 104
        %v534 = vpop.permute.xlu0 %533
        %s536 = scalar_lea.vmem %s372, 12 [#allocation8]
        %537 = vst.msk [vmem:[%s536] sm:$0xf] %vm490, %v534
        %538 = vrot.lane.b32.xlu0 %v494, 72
        %v539 = vpop.permute.xlu0 %538
        %s541 = scalar_lea.vmem %s379, 12 [#allocation10]
        %542 = vst.msk [vmem:[%s541] sm:$0xf] %vm490, %v539
        %543 = vrot.lane.b32.xlu0 %v494, 40
        %v544 = vpop.permute.xlu0 %543
        %s546 = scalar_lea.vmem %s386, 12 [#allocation11]
        %547 = vst.msk [vmem:[%s546] sm:$0xf] %vm490, %v544
        %s548 = sand.u32 %s167, 1
        %s549 = scalar_lea.sflag [#allocation4], %s548
        %s550 = sand.u32 %s167, 1
        %s551 = smul.addr %s550, 4
        %s552 = scalar_lea.vmem [#allocation7], %s551
        %s553 = sand.u32 %s33, 1
        %s554 = scalar_lea.sflag [#allocation9], %s553
        %s555 = sand.u32 %s195, 1
        %s556 = smul.addr %s555, 16
        %s557 = scalar_lea.vmem [#allocation8], %s556
        %s558 = sand.u32 %s33, 1
        %s559 = scalar_lea.sflag [#allocation9], %s558
        %s560 = sand.u32 %s223, 1
        %s561 = smul.addr %s560, 16
        %s562 = scalar_lea.vmem [#allocation10], %s561
        %s563 = sand.u32 %s251, 1
        %s564 = scalar_lea.sflag [#allocation12], %s563
        %s565 = sand.u32 %s251, 1
        %s566 = smul.addr %s565, 16
        %s567 = scalar_lea.vmem [#allocation11], %s566
        // Predicated region
        $region49: #{tpu_custom_call.1} parent=39 // pred_check
          %p568 = pneg %p177
        $region50: #{tpu_custom_call.1} parent=39 // pred_check_branch
          %570 = sbr.rel (%p568) target = $region52
        $region51: #{tpu_custom_call.1} parent=39 // pred_region
          %s572 = ssub.s32 64, 64
          %573 = vsyncadd %s549, %s572
          %s574 = sadd.s32 %s38, %s37
          %s575 = smul.addr %s574, 64
          %s576 = scalar_lea.hbm %s5, %s575
          %s578 = sshll.u32 %s552, 4
          %s579 = int_to_ptr.vmem [resolvable:$true] %s578
          %581 = dma.vmem_to_hbm [thread:$0]  %s579, 64, %s576, %s549
        $region52: #{tpu_custom_call.1} parent=39 // pred_fallthru
          _
        // Predicated region
        $region53: #{tpu_custom_call.1} parent=39 // pred_check
          %p582 = pneg %p205
        $region54: #{tpu_custom_call.1} parent=39 // pred_check_branch
          %584 = sbr.rel (%p582) target = $region56
        $region55: #{tpu_custom_call.1} parent=39 // pred_region
          %s586 = ssub.s32 256, 256
          %587 = vsyncadd %s554, %s586
          %s588 = smul.addr %s37, 4
          %s589 = sadd.s32 %s38, %s588
          %s590 = smul.addr %s589, 64
          %s591 = scalar_lea.hbm %s6, %s590
          %s592 = sshll.u32 %s557, 4
          %s593 = int_to_ptr.vmem [resolvable:$true] %s592
          %598 = dma.vmem_to_hbm [thread:$0]  %s593, 256, %s591, %s554, 64, 64, 4
        $region56: #{tpu_custom_call.1} parent=39 // pred_fallthru
          _
        // Predicated region
        $region57: #{tpu_custom_call.1} parent=39 // pred_check
          %p599 = pneg %p233
        $region58: #{tpu_custom_call.1} parent=39 // pred_check_branch
          %601 = sbr.rel (%p599) target = $region60
        $region59: #{tpu_custom_call.1} parent=39 // pred_region
          %s603 = ssub.s32 256, 256
          %604 = vsyncadd %s559, %s603
          %s605 = smul.addr %s37, 4
          %s606 = sadd.s32 %s38, %s605
          %s607 = smul.addr %s606, 64
          %s608 = scalar_lea.hbm %s7, %s607
          %s609 = sshll.u32 %s562, 4
          %s610 = int_to_ptr.vmem [resolvable:$true] %s609
          %615 = dma.vmem_to_hbm [thread:$0]  %s610, 256, %s608, %s559, 64, 64, 4
        $region60: #{tpu_custom_call.1} parent=39 // pred_fallthru
          _
        // Predicated region
        $region61: #{tpu_custom_call.1} parent=39 // pred_check
          %p616 = pneg %p261
        $region62: #{tpu_custom_call.1} parent=39 // pred_check_branch
          %618 = sbr.rel (%p616) target = $region64
        $region63: #{tpu_custom_call.1} parent=39 // pred_region
          %s620 = ssub.s32 256, 256
          %621 = vsyncadd %s564, %s620
          %s622 = smul.addr %s37, 4
          %s623 = sadd.s32 %s38, %s622
          %s624 = smul.addr %s623, 64
          %s625 = scalar_lea.hbm %s8, %s624
          %s626 = sshll.u32 %s567, 4
          %s627 = int_to_ptr.vmem [resolvable:$true] %s626
          %632 = dma.vmem_to_hbm [thread:$0]  %s627, 256, %s625, %s564, 64, 64, 4
        $region64: #{tpu_custom_call.1} parent=39 // pred_fallthru
          _
      $region40: #{tpu_custom_call.1} parent=5 // pred_fallthru
        _
      %p633 = scmp.le.s32.totalorder 2, %s28
      // Predicated region
      $region65: #{tpu_custom_call.1} parent=5 // pred_check
        %p634 = pneg %p633
      $region66: #{tpu_custom_call.1} parent=5 // pred_check_branch
        %636 = sbr.rel (%p634) target = $region68
      $region67: #{tpu_custom_call.1} parent=5 // pred_region
        %s637 = ssub.s32 %s28, 2
        // Predicated region
        $region69: #{tpu_custom_call.1} parent=67 // pred_check
          %p638 = pneg %p183
        $region70: #{tpu_custom_call.1} parent=67 // pred_check_branch
          %640 = sbr.rel (%p638) target = $region72
        $region71: #{tpu_custom_call.1} parent=67 // pred_region
          %s641 = sand.u32 %s168, 1
          %s642 = scalar_lea.sflag [#allocation4], %s641
          %s643 = sand.u32 %s168, 1
          %s644 = smul.addr %s643, 4
          %s645 = scalar_lea.vmem [#allocation7], %s644
          %646 = dma.done %s642, 64
        $region72: #{tpu_custom_call.1} parent=67 // pred_fallthru
          _
        // Predicated region
        $region73: #{tpu_custom_call.1} parent=67 // pred_check
          %p647 = pneg %p211
        $region74: #{tpu_custom_call.1} parent=67 // pred_check_branch
          %649 = sbr.rel (%p647) target = $region76
        $region75: #{tpu_custom_call.1} parent=67 // pred_region
          %s650 = sand.u32 %s34, 1
          %s651 = scalar_lea.sflag [#allocation9], %s650
          %s652 = sand.u32 %s196, 1
          %s653 = smul.addr %s652, 16
          %s654 = scalar_lea.vmem [#allocation8], %s653
          %655 = dma.done %s651, 256
        $region76: #{tpu_custom_call.1} parent=67 // pred_fallthru
          _
        // Predicated region
        $region77: #{tpu_custom_call.1} parent=67 // pred_check
          %p656 = pneg %p239
        $region78: #{tpu_custom_call.1} parent=67 // pred_check_branch
          %658 = sbr.rel (%p656) target = $region80
        $region79: #{tpu_custom_call.1} parent=67 // pred_region
          %s659 = sand.u32 %s34, 1
          %s660 = scalar_lea.sflag [#allocation9], %s659
          %s661 = sand.u32 %s224, 1
          %s662 = smul.addr %s661, 16
          %s663 = scalar_lea.vmem [#allocation10], %s662
          %664 = dma.done %s660, 256
        $region80: #{tpu_custom_call.1} parent=67 // pred_fallthru
          _
        // Predicated region
        $region81: #{tpu_custom_call.1} parent=67 // pred_check
          %p665 = pneg %p267
        $region82: #{tpu_custom_call.1} parent=67 // pred_check_branch
          %667 = sbr.rel (%p665) target = $region84
        $region83: #{tpu_custom_call.1} parent=67 // pred_region
          %s668 = sand.u32 %s252, 1
          %s669 = scalar_lea.sflag [#allocation12], %s668
          %s670 = sand.u32 %s252, 1
          %s671 = smul.addr %s670, 16
          %s672 = scalar_lea.vmem [#allocation11], %s671
          %673 = dma.done %s669, 256
        $region84: #{tpu_custom_call.1} parent=67 // pred_fallthru
          _
      $region68: #{tpu_custom_call.1} parent=5 // pred_fallthru
        _
    $region6: #{tpu_custom_call.1} parent=1 // loop_footer
      %s32 = sadd.s32 1, %s28
    $region7: #{tpu_custom_call.1} parent=1 // loop_footer_branch
      %27 = sbr.rel target = $region3
    $region8: #{tpu_custom_call.1} parent=1 // loop_exit
      _
    %674 = vsyncpa [#allocation3], 1
    %s675 = scalar_lea.sflag [#allocation3], 1
    %676 = vsyncpa %s675, 1
    %677 = vsyncpa [#allocation6], 1
    %678 = vsyncpa [#allocation4], 1
    %s679 = scalar_lea.sflag [#allocation4], 1
    %680 = vsyncpa %s679, 1
    %681 = vsyncpa [#allocation9], 1
    %s682 = scalar_lea.sflag [#allocation9], 1
    %683 = vsyncpa %s682, 1
    %684 = vsyncpa [#allocation12], 1
    %s685 = scalar_lea.sflag [#allocation12], 1
    %686 = vsyncpa %s685, 1

</llo_original>
